<compile_context>
chip_gen: v5e
topology: v5e:2x2
jax: 0.10.0
libtpu: 0.0.40
codegen_flags: <defaults>
</compile_context>

<pallas_src>
import jax
import jax.numpy as jnp
from jax.experimental import pallas as pl
from jax.experimental.pallas import tpu as pltpu

_LANES = 128
_TARGET_TILE_BYTES = 4 * 1024 * 1024   # per-buffer tile; x4 (dbl-buffered in+out) = 16 MiB
_VMEM_LIMIT_BYTES = 32 * 1024 * 1024   # within scoped VMEM on v5e / v6e / v7x
_SMALL_COPY_BYTES = 4 * 1024 * 1024    # single-block budget for non-lane-aligned totals


def _copy_kernel(x_ref, o_ref):
    # Identity copy of one lane-dense tile (or of the whole array when the
    # wrapper uses a single full-array block).
    o_ref[...] = x_ref[...]


def _native_sublanes(dtype):
    """Native second-minor tile multiple: 8 for 4B, 16 for 2B, 32 for 1B dtypes."""
    itemsize = jnp.dtype(dtype).itemsize
    return max(8, 32 // max(itemsize, 1))


def _resolve_shape(total, shape):
    """Resolve a torch.view-style shape (supports a single -1)."""
    shape = tuple(int(s) for s in shape)
    if shape.count(-1) > 1:
        raise ValueError("only one -1 allowed in the target shape")
    if -1 in shape:
        idx = shape.index(-1)
        known = 1
        for j, s in enumerate(shape):
            if j != idx:
                known *= s
        if known == 0 or total % known != 0:
            raise ValueError(f"cannot view {total} elements as {shape}")
        shape = shape[:idx] + (total // known,) + shape[idx + 1:]
    prod = 1
    for s in shape:
        prod *= s
    if prod != total:
        raise ValueError(f"cannot view {total} elements as {shape}")
    return shape


def _materialized_copy(x, target):
    """Byte-exact copy of x, returned with the target shape."""
    total = x.size
    dtype = x.dtype
    itemsize = jnp.dtype(dtype).itemsize
    nbytes = total * itemsize
    cost = pl.CostEstimate(flops=0, transcendentals=0, bytes_accessed=2 * nbytes)

    if total % _LANES == 0:
        # Lane-dense streaming copy over a (rows, 128) flat view.
        rows = total // _LANES
        x2d = x.reshape(rows, _LANES)                    # metadata-only
        sub = _native_sublanes(dtype)
        max_rows = max(sub, (_TARGET_TILE_BYTES // (_LANES * itemsize)) // sub * sub)
        if rows <= max_rows:
            tile_rows = rows                             # full-dim block (exempt from /8 rule)
        else:
            tile_rows = max_rows                         # native-sublane multiple; ragged last
                                                         # block handled by boundary masking
        grid = (pl.cdiv(rows, tile_rows),)
        out2d = pl.pallas_call(
            _copy_kernel,
            out_shape=jax.ShapeDtypeStruct((rows, _LANES), dtype),
            grid=grid,
            in_specs=[pl.BlockSpec((tile_rows, _LANES), lambda i: (i, 0))],
            out_specs=pl.BlockSpec((tile_rows, _LANES), lambda i: (i, 0)),
            compiler_params=pltpu.CompilerParams(
                dimension_semantics=("parallel",),
                vmem_limit_bytes=_VMEM_LIMIT_BYTES),
            cost_estimate=cost,
        )(x2d)
        return out2d.reshape(target)

    if nbytes <= _SMALL_COPY_BYTES:
        # Non-lane-aligned total: one full-array block copy, no pad/slice ops.
        x2d = x.reshape(1, total)                        # metadata-only
        out2d = pl.pallas_call(
            _copy_kernel,
            out_shape=jax.ShapeDtypeStruct((1, total), dtype),
            cost_estimate=cost,
        )(x2d)
        return out2d.reshape(target)

    # TODO(synk): huge non-lane-aligned materialized copies (HBM->HBM DMA or a
    # masked ragged-tail tiling); metadata reshape keeps forward semantics exact.
    return jnp.reshape(x, target)


def reshape_forward(x, shape, materialize=False):
    """Pallas equivalent of Reshape(*shape).forward(x) == x.view(shape).

    By default this is metadata-only (zero HBM traffic), matching torch .view.
    Pass materialize=True to force a fresh buffer via the Pallas copy kernel.
    """
    target = _resolve_shape(x.size, shape)
    if not materialize:
        return jnp.reshape(x, target)
    return _materialized_copy(x, target)


if __name__ == "__main__":
    key = jax.random.PRNGKey(0)
    k0, k1, k2 = jax.random.split(key, 3)

    # Typical use of Reshape in heads.py: flatten conv features per batch row.
    B, C, H, W = 2, 4, 16, 16
    x = jax.random.normal(k0, (B, C, H, W), dtype=jnp.float32)
    ref = x.reshape(B, -1)

    # Default path: metadata-only view (no kernel launch, no HBM traffic).
    out_view = jax.block_until_ready(reshape_forward(x, (B, -1)))
    assert out_view.shape == (B, C * H * W)
    assert jnp.array_equal(out_view, ref), "view path mismatch"

    # Materialized copy via the Pallas kernel (lane-dense tiled path).
    out_copy = jax.block_until_ready(reshape_forward(x, (B, -1), materialize=True))
    assert out_copy.shape == (B, C * H * W)
    assert jnp.array_equal(out_copy, ref), "materialized path mismatch"

    # bf16 exercises dtype-aware native-sublane tiling (multiples of 16 rows).
    xb = jax.random.normal(k1, (4, 16, 64), dtype=jnp.bfloat16)
    out_b = jax.block_until_ready(reshape_forward(xb, (-1, 128), materialize=True))
    assert out_b.shape == (32, 128)
    assert jnp.array_equal(out_b, xb.reshape(32, 128)), "bf16 path mismatch"

    # Non-lane-aligned total (105 elements): single full-block copy, no pad/slice.
    y = jax.random.normal(k2, (3, 5, 7), dtype=jnp.float32)
    out2 = jax.block_until_ready(reshape_forward(y, (7, 15), materialize=True))
    assert out2.shape == (7, 15)
    assert jnp.array_equal(out2, y.reshape(7, 15)), "ragged path mismatch"

    print("KERNEL_OK")
</pallas_src>

<mosaic_0001>
module attributes {stable_mosaic.version = 11 : i64} {
  func.func @_copy_kernel(%arg0: i32, %arg1: memref<16x128xf32, #tpu.memory_space<vmem>>, %arg2: memref<16x128xf32, #tpu.memory_space<vmem>>) attributes {dimension_semantics = [#tpu.dimension_semantics<parallel>], iteration_bounds = array<i64: 1>, scalar_prefetch = 0 : i64, scratch_operands = 0 : i64, tpu.core_type = #tpu.core_type<tc>, window_params = [{transform_indices = @transform_0, window_bounds = array<i64: 16, 128>}, {transform_indices = @transform_1, window_bounds = array<i64: 16, 128>}]} {
    %c0 = arith.constant 0 : index
    %c0_0 = arith.constant 0 : index
    %0 = vector.load %arg1[%c0, %c0_0] : memref<16x128xf32, #tpu.memory_space<vmem>>, vector<16x128xf32>
    %c0_1 = arith.constant 0 : index
    %c0_2 = arith.constant 0 : index
    %1 = vector.load %arg2[%c0_1, %c0_2] : memref<16x128xf32, #tpu.memory_space<vmem>>, vector<16x128xf32>
    tpu.vector_store %arg2[%c0_1, %c0_2], %0 {strides = array<i32>} : memref<16x128xf32, #tpu.memory_space<vmem>>, vector<16x128xf32>,
    return
  }
  func.func @transform_0(%arg0: i32) -> (i32, i32) {
    %c0_i32 = arith.constant 0 : i32
    %c0_i32_0 = arith.constant 0 : i32
    return %arg0, %c0_i32 : i32, i32
  }
  func.func @transform_1(%arg0: i32) -> (i32, i32) {
    %c0_i32 = arith.constant 0 : i32
    %c0_i32_0 = arith.constant 0 : i32
    return %arg0, %c0_i32 : i32, i32
  }
}

</mosaic_0001>

<llo_original>
// kernel: tpu_custom_call.1
$region0: #{tpu_custom_call.1}
  #allocation0 [shape = 'u32[]', space=smem, size = 0x4, offset = 0x4, fixed_abs, tag = 'smem constant byte address 0x4 - core index']
  #allocation1 [shape = 'u32[72,128]{1,0:T(1,128)}', space=vmem, size = 0x9000, scoped, tag = 'internal scratch']
  %s0 = inlined_call_operand.hbm [shape: f32[16,128], index: 0, kind: input, shape index: {}]
  %s1 = inlined_call_operand.hbm [shape: f32[16,128], index: 1, kind: output, shape index: {}]
  %s2 = sld [smem:[#allocation0]]
  $region18: #{tpu_custom_call.1} parent=0
    _
  %s4 = ssub.s32 1, %s2
  %s5 = scalar_select 0, %s4, %s2
  $region1: #{tpu_custom_call.1} parent=0
    #allocation2 [shape = 'u8[8192]{0}', space=vmem, size = 0x2000, scoped, tag = 'input window, operand 0, single buffered']
    #allocation3 [shape = 's32[1]{0}', space=sflag, size = 0x4, scoped, tag = 'scoped memory for tpu_custom_call.1']
    #allocation4 [shape = 's32[1]{0}', space=sflag, size = 0x4, scoped, tag = 'scoped memory for tpu_custom_call.1']
    #allocation5 [shape = 'u8[8192]{0}', space=vmem, size = 0x2000, scoped, tag = 'output window, operand 0, single buffered']
    %6 = vsyncpa [#allocation3], 0
    %7 = vsyncpa [#allocation4], 0
    // Predicated region
    $region2: #{tpu_custom_call.1} parent=1 // pred_check
      _
    $region3: #{tpu_custom_call.1} parent=1 // pred_check_branch
      %9 = sbr.rel (0) target = $region5
    $region4: #{tpu_custom_call.1} parent=1 // pred_region
      %11 = vsyncadd [#allocation3], 0
      %s12 = sshll.u32 %s0, 4
      %s13 = int_to_ptr.hbm [resolvable:$true] %s12
      %s14 = sshll.u32 [#allocation2], 4
      %s15 = int_to_ptr.vmem [resolvable:$true] %s14
      %20 = dma.hbm_to_vmem [thread:$0]  %s13, 256, %s15, [#allocation3], 128, 128, 8
    $region5: #{tpu_custom_call.1} parent=1 // pred_fallthru
      _
    // Predicated region
    $region6: #{tpu_custom_call.1} parent=1 // pred_check
      _
    $region7: #{tpu_custom_call.1} parent=1 // pred_check_branch
      %22 = sbr.rel (0) target = $region9
    $region8: #{tpu_custom_call.1} parent=1 // pred_region
      %24 = dma.done [#allocation3], 256
    $region9: #{tpu_custom_call.1} parent=1 // pred_fallthru
      _
    %v25 = vld [vmem:[#allocation2] sm:$0xff]
    %v26 = vld [vmem:[#allocation2 + $0x8] sm:$0xff]
    %27 = vst [vmem:[#allocation5] sm:$0xff] %v25
    %28 = vst [vmem:[#allocation5 + $0x8] sm:$0xff] %v26
    // Predicated region
    $region10: #{tpu_custom_call.1} parent=1 // pred_check
      _
    $region11: #{tpu_custom_call.1} parent=1 // pred_check_branch
      %30 = sbr.rel (0) target = $region13
    $region12: #{tpu_custom_call.1} parent=1 // pred_region
      %32 = vsyncadd [#allocation4], 0
      %s33 = sshll.u32 [#allocation5], 4
      %s34 = int_to_ptr.vmem [resolvable:$true] %s33
      %s35 = sshll.u32 %s1, 4
      %s36 = int_to_ptr.hbm [resolvable:$true] %s35
      %41 = dma.vmem_to_hbm [thread:$0]  %s34, 256, %s36, [#allocation4], 128, 128, 8
    $region13: #{tpu_custom_call.1} parent=1 // pred_fallthru
      _
    // Predicated region
    $region14: #{tpu_custom_call.1} parent=1 // pred_check
      _
    $region15: #{tpu_custom_call.1} parent=1 // pred_check_branch
      %43 = sbr.rel (0) target = $region17
    $region16: #{tpu_custom_call.1} parent=1 // pred_region
      %45 = dma.done [#allocation4], 256
    $region17: #{tpu_custom_call.1} parent=1 // pred_fallthru
      _
    %46 = vsyncpa [#allocation3], 1
    %47 = vsyncpa [#allocation4], 1

</llo_original>
